<compile_context>
chip_gen: v6e
topology: v6e:2x2x1
jax: 0.10.0
libtpu: 0.0.40
codegen_flags: <defaults>
</compile_context>

<pallas_src>
import functools

import jax
import jax.numpy as jnp
import numpy as np
from jax import lax
from jax.experimental import pallas as pl
from jax.experimental.pallas import tpu as pltpu

BN_EPS = 1e-5
LANE = 128
SUBLANE = 8
TILE_L_TARGET = 1024                 # output-length tile (multiple of 128)
VMEM_LIMIT = 32 * 1024 * 1024        # safe on v5e/v6e (128 MiB) and v7x (64 MiB)
PHASE2_BLOCK_BYTES = 1 << 20         # target bytes moved per phase-2 grid step


def _round_up(a, b):
    return (a + b - 1) // b * b


def _cdiv(a, b):
    return (a + b - 1) // b


def _conv_stats_kernel(xm_ref, xh_ref, w_ref, y_ref, s_ref, *, ks, tile_l, l_out, c_out):
    # xm_ref : (1, C_in_pad, tile_l)   bf16 main input tile
    # xh_ref : (1, C_in_pad, LANE)     bf16 halo-head block (next LANE columns)
    # w_ref  : (ks, C_out_pad, C_in_pad) bf16 per-tap weights (resident)
    # y_ref  : (1, C_out, tile_l)      bf16 conv output tile (lane dense)
    # s_ref  : (1, 1, C_out_pad, 2)    f32 packed per-tile [sum, sum_sq]
    xm = xm_ref[0]
    xh = xh_ref[0]
    win = jnp.concatenate([xm, xh], axis=-1)           # (C_in_pad, tile_l + LANE)

    c_out_pad = w_ref.shape[1]
    acc = jnp.zeros((c_out_pad, tile_l), jnp.float32)
    for t in range(ks):                                # static unroll over taps
        xt = win[:, t:t + tile_l]                      # static lane-offset slice
        acc = acc + jnp.dot(w_ref[t], xt, preferred_element_type=jnp.float32)

    # bf16 intermediate, only the real output channels (no channel padding in HBM)
    y_ref[0] = acc[:c_out].astype(y_ref.dtype)

    # packed partial BatchNorm statistics; masking only on the boundary tile
    j = pl.program_id(1)
    last = pl.num_programs(1) - 1

    @pl.when(j < last)
    def _():
        s1 = jnp.sum(acc, axis=1, keepdims=True)
        s2 = jnp.sum(acc * acc, axis=1, keepdims=True)
        s_ref[0, 0] = jnp.concatenate([s1, s2], axis=1)

    @pl.when(j == last)
    def _():
        lane = lax.broadcasted_iota(jnp.int32, (1, tile_l), 1)
        valid = (j * tile_l + lane) < l_out
        m = jnp.where(valid, acc, 0.0)
        s1 = jnp.sum(m, axis=1, keepdims=True)
        s2 = jnp.sum(m * m, axis=1, keepdims=True)
        s_ref[0, 0] = jnp.concatenate([s1, s2], axis=1)


def _bn_relu_kernel(y_ref, scale_ref, shift_ref, o_ref):
    # y_ref: (Nb, C_out, tile_l) bf16 ; scale/shift: (C_out, 1) f32 ; o_ref f32
    y = y_ref[...].astype(jnp.float32)
    o_ref[...] = jnp.maximum(y * scale_ref[...] + shift_ref[...], 0.0).astype(o_ref.dtype)


@functools.partial(jax.jit, static_argnames=("ks", "stride", "pad"))
def conv1d_bn_relu(x, weight, gamma, beta, *, ks=3, stride=1, pad=1):
    # x: (N, C_in, L); weight: (C_out, C_in, ks) (PyTorch layout); gamma/beta: (C_out,)
    if stride != 1:
        # TODO(synk): strided conv needs a strided window gather; only the
        # module-default stride=1 path is implemented in Pallas.
        raise NotImplementedError("Pallas Conv1D path implements stride=1 only.")
    assert ks - 1 <= LANE, "tap halo must fit in one 128-lane halo block"

    N, C_in, L = x.shape
    C_out = weight.shape[0]
    L_out = L + 2 * pad - ks + 1

    c_in_pad = _round_up(C_in, SUBLANE)
    c_out_pad = _round_up(C_out, SUBLANE)
    tile_l = min(TILE_L_TARGET, _round_up(L_out, LANE))
    num_tiles = _cdiv(L_out, tile_l)
    l_out_pad = num_tiles * tile_l
    halo_blocks_per_tile = tile_l // LANE

    # cast to bf16 FIRST, then one pad op (conv pad + channel pad + tile/halo pad)
    x_cols = l_out_pad + LANE
    xp = jnp.pad(x.astype(jnp.bfloat16),
                 ((0, 0), (0, c_in_pad - C_in), (pad, x_cols - L - pad)))

    # per-tap weights (ks, C_out_pad, C_in_pad), bf16, resident (constant index_map)
    w_taps = jnp.transpose(weight, (2, 0, 1))
    w_taps = jnp.pad(w_taps, ((0, 0), (0, c_out_pad - C_out), (0, c_in_pad - C_in)))
    w_taps = w_taps.astype(jnp.bfloat16)

    conv_flops = 2 * N * l_out_pad * c_out_pad * c_in_pad * ks
    conv_bytes = (N * num_tiles * c_in_pad * (tile_l + LANE) * 2   # main + halo reads
                  + w_taps.size * 2
                  + N * C_out * l_out_pad * 2                       # bf16 y write
                  + N * num_tiles * c_out_pad * 2 * 4)              # packed stats

    kernel1 = functools.partial(_conv_stats_kernel, ks=ks, tile_l=tile_l,
                                l_out=L_out, c_out=C_out)
    y_bf16, stats = pl.pallas_call(
        kernel1,
        out_shape=(
            jax.ShapeDtypeStruct((N, C_out, l_out_pad), jnp.bfloat16),
            jax.ShapeDtypeStruct((N, num_tiles, c_out_pad, 2), jnp.float32),
        ),
        grid=(N, num_tiles),
        in_specs=[
            # same array passed twice: main tile + halo-head block (no HBM stack)
            pl.BlockSpec((1, c_in_pad, tile_l), lambda n, j: (n, 0, j)),
            pl.BlockSpec((1, c_in_pad, LANE),
                         lambda n, j: (n, 0, (j + 1) * halo_blocks_per_tile)),
            pl.BlockSpec((ks, c_out_pad, c_in_pad), lambda n, j: (0, 0, 0)),
        ],
        out_specs=(
            pl.BlockSpec((1, C_out, tile_l), lambda n, j: (n, 0, j)),
            pl.BlockSpec((1, 1, c_out_pad, 2), lambda n, j: (n, j, 0, 0)),
        ),
        compiler_params=pltpu.CompilerParams(
            dimension_semantics=("parallel", "parallel"),
            vmem_limit_bytes=VMEM_LIMIT,
        ),
        cost_estimate=pl.CostEstimate(
            flops=conv_flops, transcendentals=0, bytes_accessed=conv_bytes),
    )(xp, xp, w_taps)

    # BatchNorm1d training-mode batch statistics from the packed per-tile sums
    # (single-pass E[x^2] - E[x]^2 in f32; biased variance like torch BN).
    cnt = jnp.float32(N * L_out)
    s_sum = jnp.sum(stats, axis=(0, 1))                          # (c_out_pad, 2)
    mean = s_sum[:C_out, 0:1] / cnt                              # (C_out, 1)
    ex2 = s_sum[:C_out, 1:2] / cnt
    var = jnp.maximum(ex2 - mean * mean, 0.0)
    inv_std = lax.rsqrt(var + BN_EPS)
    scale = gamma.astype(jnp.float32).reshape(C_out, 1) * inv_std
    shift = beta.astype(jnp.float32).reshape(C_out, 1) - mean * scale
    # TODO(synk): BatchNorm running_mean/running_var are not updated; only the
    # training-mode forward activation is produced.

    # phase 2: y*scale + shift, ReLU.  Batched over N so each grid step moves
    # ~PHASE2_BLOCK_BYTES; output is written directly at the final (N,C_out,L_out)
    # shape (ragged last L block handled by the grid) -> no trailing slice pass.
    nb = max(1, min(N, PHASE2_BLOCK_BYTES // max(1, C_out * tile_l * 6)))
    n_blocks = _cdiv(N, nb)
    bn_bytes = (N * C_out * l_out_pad * 2 + N * C_out * L_out * 4 + 2 * C_out * 4)

    out = pl.pallas_call(
        _bn_relu_kernel,
        out_shape=jax.ShapeDtypeStruct((N, C_out, L_out), jnp.float32),
        grid=(n_blocks, num_tiles),
        in_specs=[
            pl.BlockSpec((nb, C_out, tile_l), lambda b, j: (b, 0, j)),
            pl.BlockSpec((C_out, 1), lambda b, j: (0, 0)),
            pl.BlockSpec((C_out, 1), lambda b, j: (0, 0)),
        ],
        out_specs=pl.BlockSpec((nb, C_out, tile_l), lambda b, j: (b, 0, j)),
        compiler_params=pltpu.CompilerParams(
            dimension_semantics=("parallel", "parallel"),
            vmem_limit_bytes=VMEM_LIMIT,
        ),
        cost_estimate=pl.CostEstimate(
            flops=3 * N * C_out * l_out_pad, transcendentals=0,
            bytes_accessed=bn_bytes),
    )(y_bf16, scale, shift)

    return out


def _reference(x, weight, gamma, beta, *, ks=3, stride=1, pad=1):
    # Pure-JAX reference matching the kernel's numerics contract:
    # bf16-rounded conv inputs, f32 accumulation, f32 batch stats computed from
    # the f32 conv result, bf16-rounded conv intermediate for the BN/ReLU stage.
    xq = x.astype(jnp.bfloat16).astype(jnp.float32)
    wq = weight.astype(jnp.bfloat16).astype(jnp.float32)
    y = lax.conv_general_dilated(
        xq, wq, window_strides=(stride,), padding=[(pad, pad)],
        dimension_numbers=("NCH", "OIH", "NCH"),
    )
    mean = jnp.mean(y, axis=(0, 2), keepdims=True)
    var = jnp.mean((y - mean) ** 2, axis=(0, 2), keepdims=True)
    yb = y.astype(jnp.bfloat16).astype(jnp.float32)
    yn = (yb - mean) * lax.rsqrt(var + BN_EPS)
    out = yn * gamma[None, :, None] + beta[None, :, None]
    return jnp.maximum(out, 0.0)


if __name__ == "__main__":
    key = jax.random.PRNGKey(0)
    k_x, k_w = jax.random.split(key)

    N, C_in, L = 2, 4, 16
    C_out, ks, stride, pad = 8, 3, 1, 1

    x = jax.random.normal(k_x, (N, C_in, L), dtype=jnp.float32)
    # Deterministic conv weight init (kaiming-uniform-like bound, like nn.Conv1d)
    fan_in = C_in * ks
    bound = 1.0 / np.sqrt(fan_in)
    weight = jax.random.uniform(
        k_w, (C_out, C_in, ks), minval=-bound, maxval=bound, dtype=jnp.float32
    )
    # BatchNorm1d default init: weight=1, bias=0
    gamma = jnp.ones((C_out,), dtype=jnp.float32)
    beta = jnp.zeros((C_out,), dtype=jnp.float32)

    out = conv1d_bn_relu(x, weight, gamma, beta, ks=ks, stride=stride, pad=pad)
    out = jax.block_until_ready(out)

    ref = _reference(x, weight, gamma, beta, ks=ks, stride=stride, pad=pad)
    L_out = (L + 2 * pad - ks) // stride + 1
    assert out.shape == (N, C_out, L_out)
    assert out.dtype == jnp.float32
    assert np.allclose(np.asarray(out), np.asarray(ref), atol=5e-3, rtol=5e-3)

    print("KERNEL_OK")
</pallas_src>

<mosaic_0001>
module attributes {stable_mosaic.version = 11 : i64} {
  func.func @_bn_relu_kernel(%arg0: i32, %arg1: i32, %arg2: memref<2x8x128xbf16, #tpu.memory_space<vmem>>, %arg3: memref<8x1xf32, #tpu.memory_space<vmem>>, %arg4: memref<8x1xf32, #tpu.memory_space<vmem>>, %arg5: memref<2x8x128xf32, #tpu.memory_space<vmem>>) attributes {dimension_semantics = [#tpu.dimension_semantics<parallel>, #tpu.dimension_semantics<parallel>], iteration_bounds = array<i64: 1, 1>, scalar_prefetch = 0 : i64, scratch_operands = 0 : i64, tpu.core_type = #tpu.core_type<tc>, window_params = [{transform_indices = @transform_0, window_bounds = array<i64: 2, 8, 128>}, {pipeline_mode = #tpu.pipeline_mode<synchronous>, transform_indices = @transform_1, window_bounds = array<i64: 8, 1>}, {pipeline_mode = #tpu.pipeline_mode<synchronous>, transform_indices = @transform_2, window_bounds = array<i64: 8, 1>}, {transform_indices = @transform_3, window_bounds = array<i64: 2, 8, 128>}]} {
    %c0 = arith.constant 0 : index
    %c0_0 = arith.constant 0 : index
    %c0_1 = arith.constant 0 : index
    %0 = vector.load %arg2[%c0, %c0_0, %c0_1] : memref<2x8x128xbf16, #tpu.memory_space<vmem>>, vector<2x8x128xbf16>
    %1 = arith.extf %0 : vector<2x8x128xbf16> to vector<2x8x128xf32>
    %c0_2 = arith.constant 0 : index
    %c0_3 = arith.constant 0 : index
    %2 = vector.load %arg3[%c0_2, %c0_3] : memref<8x1xf32, #tpu.memory_space<vmem>>, vector<8x1xf32>
    %3 = vector.shape_cast %2 : vector<8x1xf32> to vector<1x8x1xf32>
    %4 = vector.broadcast %3 : vector<1x8x1xf32> to vector<2x8x128xf32>
    %5 = arith.mulf %1, %4 : vector<2x8x128xf32>
    %c0_4 = arith.constant 0 : index
    %c0_5 = arith.constant 0 : index
    %6 = vector.load %arg4[%c0_4, %c0_5] : memref<8x1xf32, #tpu.memory_space<vmem>>, vector<8x1xf32>
    %7 = vector.shape_cast %6 : vector<8x1xf32> to vector<1x8x1xf32>
    %8 = vector.broadcast %7 : vector<1x8x1xf32> to vector<2x8x128xf32>
    %9 = arith.addf %5, %8 : vector<2x8x128xf32>
    %cst = arith.constant 0.000000e+00 : f32
    %10 = vector.broadcast %cst : f32 to vector<2x8x128xf32>
    %11 = arith.maximumf %9, %10 : vector<2x8x128xf32>
    %c0_6 = arith.constant 0 : index
    %c0_7 = arith.constant 0 : index
    %c0_8 = arith.constant 0 : index
    %12 = vector.load %arg5[%c0_6, %c0_7, %c0_8] : memref<2x8x128xf32, #tpu.memory_space<vmem>>, vector<2x8x128xf32>
    tpu.vector_store %arg5[%c0_6, %c0_7, %c0_8], %11 {strides = array<i32>} : memref<2x8x128xf32, #tpu.memory_space<vmem>>, vector<2x8x128xf32>,
    return
  }
  func.func @transform_0(%arg0: i32, %arg1: i32) -> (i32, i32, i32) {
    %c0_i32 = arith.constant 0 : i32
    %c0_i32_0 = arith.constant 0 : i32
    return %arg0, %c0_i32, %arg1 : i32, i32, i32
  }
  func.func @transform_1(%arg0: i32, %arg1: i32) -> (i32, i32) {
    %c0_i32 = arith.constant 0 : i32
    %c0_i32_0 = arith.constant 0 : i32
    %c0_i32_1 = arith.constant 0 : i32
    return %c0_i32, %c0_i32_0 : i32, i32
  }
  func.func @transform_2(%arg0: i32, %arg1: i32) -> (i32, i32) {
    %c0_i32 = arith.constant 0 : i32
    %c0_i32_0 = arith.constant 0 : i32
    %c0_i32_1 = arith.constant 0 : i32
    return %c0_i32, %c0_i32_0 : i32, i32
  }
  func.func @transform_3(%arg0: i32, %arg1: i32) -> (i32, i32, i32) {
    %c0_i32 = arith.constant 0 : i32
    %c0_i32_0 = arith.constant 0 : i32
    return %arg0, %c0_i32, %arg1 : i32, i32, i32
  }
}

module attributes {stable_mosaic.version = 11 : i64} {
  func.func @_conv_stats_kernel(%arg0: i32, %arg1: i32, %arg2: memref<1x8x128xbf16, #tpu.memory_space<vmem>>, %arg3: memref<1x8x128xbf16, #tpu.memory_space<vmem>>, %arg4: memref<3x8x8xbf16, #tpu.memory_space<vmem>>, %arg5: memref<1x8x128xbf16, #tpu.memory_space<vmem>>, %arg6: memref<1x1x8x2xf32, #tpu.memory_space<vmem>>) attributes {dimension_semantics = [#tpu.dimension_semantics<parallel>, #tpu.dimension_semantics<parallel>], iteration_bounds = array<i64: 2, 1>, scalar_prefetch = 0 : i64, scratch_operands = 0 : i64, tpu.core_type = #tpu.core_type<tc>, window_params = [{transform_indices = @transform_0, window_bounds = array<i64: 1, 8, 128>}, {transform_indices = @transform_1, window_bounds = array<i64: 1, 8, 128>}, {pipeline_mode = #tpu.pipeline_mode<synchronous>, transform_indices = @transform_2, window_bounds = array<i64: 3, 8, 8>}, {transform_indices = @transform_3, window_bounds = array<i64: 1, 8, 128>}, {transform_indices = @transform_4, window_bounds = array<i64: 1, 1, 8, 2>}]} {
    %c0 = arith.constant 0 : index
    %c0_0 = arith.constant 0 : index
    %c0_1 = arith.constant 0 : index
    %0 = vector.load %arg2[%c0, %c0_0, %c0_1] : memref<1x8x128xbf16, #tpu.memory_space<vmem>>, vector<1x8x128xbf16>
    %1 = vector.shape_cast %0 : vector<1x8x128xbf16> to vector<8x128xbf16>
    %c0_2 = arith.constant 0 : index
    %c0_3 = arith.constant 0 : index
    %c0_4 = arith.constant 0 : index
    %2 = vector.load %arg3[%c0_2, %c0_3, %c0_4] : memref<1x8x128xbf16, #tpu.memory_space<vmem>>, vector<1x8x128xbf16>
    %3 = vector.shape_cast %2 : vector<1x8x128xbf16> to vector<8x128xbf16>
    %4 = tpu.concatenate %1, %3 in 1 : vector<8x128xbf16>, vector<8x128xbf16> -> vector<8x256xbf16>
    %cst = arith.constant 0.000000e+00 : f32
    %5 = vector.broadcast %cst : f32 to vector<8x128xf32>
    %6 = vector.extract_strided_slice %4 {offsets = [0, 0], sizes = [8, 128], strides = [1, 1]} : vector<8x256xbf16> to vector<8x128xbf16>
    %c0_5 = arith.constant 0 : index
    %c0_6 = arith.constant 0 : index
    %c0_7 = arith.constant 0 : index
    %7 = vector.load %arg4[%c0_5, %c0_6, %c0_7] : memref<3x8x8xbf16, #tpu.memory_space<vmem>>, vector<1x8x8xbf16>
    %8 = vector.shape_cast %7 : vector<1x8x8xbf16> to vector<8x8xbf16>
    %cst_8 = arith.constant dense<0.000000e+00> : vector<8x128xf32>
    %9 = tpu.matmul %8, %6, %cst_8 {dimension_numbers = #tpu.dot_dimension_numbers<[1], [0], [0], [1], [0, 0, 1, 1], [], []>} : vector<8x8xbf16>, vector<8x128xbf16>, vector<8x128xf32> -> vector<8x128xf32>
    %10 = arith.addf %5, %9 : vector<8x128xf32>
    %11 = vector.extract_strided_slice %4 {offsets = [0, 1], sizes = [8, 128], strides = [1, 1]} : vector<8x256xbf16> to vector<8x128xbf16>
    %c1 = arith.constant 1 : index
    %c0_9 = arith.constant 0 : index
    %c0_10 = arith.constant 0 : index
    %12 = vector.load %arg4[%c1, %c0_9, %c0_10] : memref<3x8x8xbf16, #tpu.memory_space<vmem>>, vector<1x8x8xbf16>
    %13 = vector.shape_cast %12 : vector<1x8x8xbf16> to vector<8x8xbf16>
    %cst_11 = arith.constant dense<0.000000e+00> : vector<8x128xf32>
    %14 = tpu.matmul %13, %11, %cst_11 {dimension_numbers = #tpu.dot_dimension_numbers<[1], [0], [0], [1], [0, 0, 1, 1], [], []>} : vector<8x8xbf16>, vector<8x128xbf16>, vector<8x128xf32> -> vector<8x128xf32>
    %15 = arith.addf %10, %14 : vector<8x128xf32>
    %16 = vector.extract_strided_slice %4 {offsets = [0, 2], sizes = [8, 128], strides = [1, 1]} : vector<8x256xbf16> to vector<8x128xbf16>
    %c2 = arith.constant 2 : index
    %c0_12 = arith.constant 0 : index
    %c0_13 = arith.constant 0 : index
    %17 = vector.load %arg4[%c2, %c0_12, %c0_13] : memref<3x8x8xbf16, #tpu.memory_space<vmem>>, vector<1x8x8xbf16>
    %18 = vector.shape_cast %17 : vector<1x8x8xbf16> to vector<8x8xbf16>
    %cst_14 = arith.constant dense<0.000000e+00> : vector<8x128xf32>
    %19 = tpu.matmul %18, %16, %cst_14 {dimension_numbers = #tpu.dot_dimension_numbers<[1], [0], [0], [1], [0, 0, 1, 1], [], []>} : vector<8x8xbf16>, vector<8x128xbf16>, vector<8x128xf32> -> vector<8x128xf32>
    %20 = arith.addf %15, %19 : vector<8x128xf32>
    %21 = arith.truncf %20 : vector<8x128xf32> to vector<8x128xbf16>
    %c0_15 = arith.constant 0 : index
    %c0_16 = arith.constant 0 : index
    %c0_17 = arith.constant 0 : index
    %22 = vector.load %arg5[%c0_15, %c0_16, %c0_17] : memref<1x8x128xbf16, #tpu.memory_space<vmem>>, vector<1x8x128xbf16>
    %23 = vector.shape_cast %22 : vector<1x8x128xbf16> to vector<8x128xbf16>
    %24 = vector.shape_cast %21 : vector<8x128xbf16> to vector<1x8x128xbf16>
    tpu.vector_store %arg5[%c0_15, %c0_16, %c0_17], %24 {strides = array<i32>} : memref<1x8x128xbf16, #tpu.memory_space<vmem>>, vector<1x8x128xbf16>,
    %c0_i32 = arith.constant 0 : i32
    %25 = arith.cmpi slt, %arg1, %c0_i32 : i32
    %26 = arith.extui %25 : i1 to i32
    %c0_i32_18 = arith.constant 0 : i32
    %27 = arith.cmpi ne, %26, %c0_i32_18 : i32
    scf.if %27 {
      %cst_21 = arith.constant dense<0.000000e+00> : vector<8xf32>
      %31 = vector.multi_reduction <add>, %20, %cst_21 [1] : vector<8x128xf32> to vector<8xf32>
      %32 = vector.shape_cast %31 : vector<8xf32> to vector<8x1xf32>
      %33 = arith.mulf %20, %20 : vector<8x128xf32>
      %cst_22 = arith.constant dense<0.000000e+00> : vector<8xf32>
      %34 = vector.multi_reduction <add>, %33, %cst_22 [1] : vector<8x128xf32> to vector<8xf32>
      %35 = vector.shape_cast %34 : vector<8xf32> to vector<8x1xf32>
      %36 = tpu.concatenate %32, %35 in 1 : vector<8x1xf32>, vector<8x1xf32> -> vector<8x2xf32>
      %c0_23 = arith.constant 0 : index
      %c0_24 = arith.constant 0 : index
      %c0_25 = arith.constant 0 : index
      %c0_26 = arith.constant 0 : index
      %37 = vector.load %arg6[%c0_23, %c0_24, %c0_25, %c0_26] : memref<1x1x8x2xf32, #tpu.memory_space<vmem>>, vector<1x1x8x2xf32>
      %38 = vector.shape_cast %37 : vector<1x1x8x2xf32> to vector<8x2xf32>
      %39 = vector.shape_cast %36 : vector<8x2xf32> to vector<1x1x8x2xf32>
      tpu.vector_store %arg6[%c0_23, %c0_24, %c0_25, %c0_26], %39 {strides = array<i32>} : memref<1x1x8x2xf32, #tpu.memory_space<vmem>>, vector<1x1x8x2xf32>,
    } else {
    }
    %c0_i32_19 = arith.constant 0 : i32
    %28 = arith.cmpi eq, %arg1, %c0_i32_19 : i32
    %29 = arith.extui %28 : i1 to i32
    %c0_i32_20 = arith.constant 0 : i32
    %30 = arith.cmpi ne, %29, %c0_i32_20 : i32
    scf.if %30 {
      %31 = tpu.iota {dimensions = array<i32: 1>} : vector<1x128xi32>
      %c128_i32 = arith.constant 128 : i32
      %32 = arith.muli %arg1, %c128_i32 : i32
      %33 = vector.broadcast %32 : i32 to vector<1x128xi32>
      %34 = arith.addi %33, %31 : vector<1x128xi32>
      %c16_i32 = arith.constant 16 : i32
      %35 = vector.broadcast %c16_i32 : i32 to vector<1x128xi32>
      %36 = arith.cmpi slt, %34, %35 : vector<1x128xi32>
      %cst_21 = arith.constant 0.000000e+00 : f32
      %37 = vector.shape_cast %36 : vector<1x128xi1> to vector<1x128xi1>
      %38 = vector.broadcast %37 : vector<1x128xi1> to vector<8x128xi1>
      %39 = vector.broadcast %cst_21 : f32 to vector<8x128xf32>
      %40 = arith.select %38, %20, %39 : vector<8x128xi1>, vector<8x128xf32>
      %cst_22 = arith.constant dense<0.000000e+00> : vector<8xf32>
      %41 = vector.multi_reduction <add>, %40, %cst_22 [1] : vector<8x128xf32> to vector<8xf32>
      %42 = vector.shape_cast %41 : vector<8xf32> to vector<8x1xf32>
      %43 = arith.mulf %40, %40 : vector<8x128xf32>
      %cst_23 = arith.constant dense<0.000000e+00> : vector<8xf32>
      %44 = vector.multi_reduction <add>, %43, %cst_23 [1] : vector<8x128xf32> to vector<8xf32>
      %45 = vector.shape_cast %44 : vector<8xf32> to vector<8x1xf32>
      %46 = tpu.concatenate %42, %45 in 1 : vector<8x1xf32>, vector<8x1xf32> -> vector<8x2xf32>
      %c0_24 = arith.constant 0 : index
      %c0_25 = arith.constant 0 : index
      %c0_26 = arith.constant 0 : index
      %c0_27 = arith.constant 0 : index
      %47 = vector.load %arg6[%c0_24, %c0_25, %c0_26, %c0_27] : memref<1x1x8x2xf32, #tpu.memory_space<vmem>>, vector<1x1x8x2xf32>
      %48 = vector.shape_cast %47 : vector<1x1x8x2xf32> to vector<8x2xf32>
      %49 = vector.shape_cast %46 : vector<8x2xf32> to vector<1x1x8x2xf32>
      tpu.vector_store %arg6[%c0_24, %c0_25, %c0_26, %c0_27], %49 {strides = array<i32>} : memref<1x1x8x2xf32, #tpu.memory_space<vmem>>, vector<1x1x8x2xf32>,
    } else {
    }
    return
  }
  func.func @transform_0(%arg0: i32, %arg1: i32) -> (i32, i32, i32) {
    %c0_i32 = arith.constant 0 : i32
    %c0_i32_0 = arith.constant 0 : i32
    return %arg0, %c0_i32, %arg1 : i32, i32, i32
  }
  func.func @transform_1(%arg0: i32, %arg1: i32) -> (i32, i32, i32) {
    %c1_i32 = arith.constant 1 : i32
    %0 = arith.addi %arg1, %c1_i32 : i32
    %c1_i32_0 = arith.constant 1 : i32
    %1 = arith.muli %0, %c1_i32_0 : i32
    %c0_i32 = arith.constant 0 : i32
    %c0_i32_1 = arith.constant 0 : i32
    return %arg0, %c0_i32, %1 : i32, i32, i32
  }
  func.func @transform_2(%arg0: i32, %arg1: i32) -> (i32, i32, i32) {
    %c0_i32 = arith.constant 0 : i32
    %c0_i32_0 = arith.constant 0 : i32
    %c0_i32_1 = arith.constant 0 : i32
    %c0_i32_2 = arith.constant 0 : i32
    return %c0_i32, %c0_i32_0, %c0_i32_1 : i32, i32, i32
  }
  func.func @transform_3(%arg0: i32, %arg1: i32) -> (i32, i32, i32) {
    %c0_i32 = arith.constant 0 : i32
    %c0_i32_0 = arith.constant 0 : i32
    return %arg0, %c0_i32, %arg1 : i32, i32, i32
  }
  func.func @transform_4(%arg0: i32, %arg1: i32) -> (i32, i32, i32, i32) {
    %c0_i32 = arith.constant 0 : i32
    %c0_i32_0 = arith.constant 0 : i32
    %c0_i32_1 = arith.constant 0 : i32
    return %arg0, %arg1, %c0_i32, %c0_i32_0 : i32, i32, i32, i32
  }
}

</mosaic_0001>

<llo_original>
// kernel: conv1d_bn_relu.3
$region0: #{conv1d_bn_relu.3}
  #allocation0 [shape = 'u32[]', space=smem, size = 0x4, offset = 0x4, fixed_abs, tag = 'smem constant byte address 0x4 - core index']
  #allocation1 [shape = 'u32[144,128]{1,0:T(1,128)}', space=vmem, size = 0x12000, scoped, tag = 'internal scratch']
  %s0 = inlined_call_operand.vmem [shape: bf16[2,8,128], index: 0, kind: input, shape index: {}]
  %s1 = inlined_call_operand.vmem [shape: f32[8,1], index: 1, kind: input, shape index: {}]
  %s2 = inlined_call_operand.vmem [shape: f32[8,1], index: 2, kind: input, shape index: {}]
  %s3 = inlined_call_operand.hbm [shape: f32[2,8,16], index: 3, kind: output, shape index: {}]
  %s4 = sld [smem:[#allocation0]]
  $region22: #{conv1d_bn_relu.3} parent=0
    _
  %s6 = ssub.s32 1, %s4
  %s7 = scalar_select 0, %s6, %s4
  $region1: #{conv1d_bn_relu.3} parent=0
    #allocation2 [shape = 'u8[8192]{0}', space=vmem, size = 0x2000, scoped, tag = 'output window, operand 0, single buffered']
    #allocation3 [shape = 's32[1]{0}', space=sflag, size = 0x4, scoped, tag = 'scoped memory for conv1d_bn_relu.3']
    %8 = vsyncpa [#allocation3], 0
    // Predicated region
    $region2: #{conv1d_bn_relu.3} parent=1 // pred_check
      _
    $region3: #{conv1d_bn_relu.3} parent=1 // pred_check_branch
      %10 = sbr.rel (0) target = $region5
    $region4: #{conv1d_bn_relu.3} parent=1 // pred_region
      _
    $region5: #{conv1d_bn_relu.3} parent=1 // pred_fallthru
      _
    // Predicated region
    $region6: #{conv1d_bn_relu.3} parent=1 // pred_check
      _
    $region7: #{conv1d_bn_relu.3} parent=1 // pred_check_branch
      %12 = sbr.rel (0) target = $region9
    $region8: #{conv1d_bn_relu.3} parent=1 // pred_region
      _
    $region9: #{conv1d_bn_relu.3} parent=1 // pred_fallthru
      _
    // Predicated region
    $region10: #{conv1d_bn_relu.3} parent=1 // pred_check
      _
    $region11: #{conv1d_bn_relu.3} parent=1 // pred_check_branch
      %14 = sbr.rel (0) target = $region13
    $region12: #{conv1d_bn_relu.3} parent=1 // pred_region
      _
    $region13: #{conv1d_bn_relu.3} parent=1 // pred_fallthru
      _
    %v15 = vld [vmem:[%s0] sm:$0xf]
    %v16 = vld [vmem:[%s0 + $0x4] sm:$0xf]
    %v17 = vunpack.c.l.bf16 %v15
    %v18 = vunpack.c.l.bf16 %v16
    %v19 = vld [vmem:[%s1] sm:$0xff]
    %21 = vset.pattern.permute.xlu0 0
    %22 = vperm.xlu0 %21, %v19
    %v23 = vpop.permute.xlu0 %22
    %v25 = vmul.f32 %v17, %v23
    %v26 = vmul.f32 %v18, %v23
    %v27 = vld [vmem:[%s2] sm:$0xff]
    %29 = vset.pattern.permute.xlu0 0
    %30 = vperm.xlu0 %29, %v27
    %v31 = vpop.permute.xlu0 %30
    %v33 = vadd.f32 %v25, %v31
    %v34 = vadd.f32 %v26, %v31
    %v35 = vmax.f32 %v33, 0.0
    %v36 = vmax.f32 %v34, 0.0
    %37 = vst [vmem:[#allocation2] sm:$0xff] %v35
    %38 = vst [vmem:[#allocation2 + $0x8] sm:$0xff] %v36
    // Predicated region
    $region14: #{conv1d_bn_relu.3} parent=1 // pred_check
      _
    $region15: #{conv1d_bn_relu.3} parent=1 // pred_check_branch
      %40 = sbr.rel (0) target = $region17
    $region16: #{conv1d_bn_relu.3} parent=1 // pred_region
      %s42 = ssub.s32 256, 256
      %43 = vsyncadd [#allocation3], %s42
      %s44 = sshll.u32 [#allocation2], 4
      %s45 = int_to_ptr.vmem [resolvable:$true] %s44
      %50 = dma.vmem_to_hbm [thread:$0]  %s45, 256, %s3, [#allocation3], 128, 128, 8
    $region17: #{conv1d_bn_relu.3} parent=1 // pred_fallthru
      _
    // Predicated region
    $region18: #{conv1d_bn_relu.3} parent=1 // pred_check
      _
    $region19: #{conv1d_bn_relu.3} parent=1 // pred_check_branch
      %52 = sbr.rel (0) target = $region21
    $region20: #{conv1d_bn_relu.3} parent=1 // pred_region
      %53 = dma.done [#allocation3], 256
    $region21: #{conv1d_bn_relu.3} parent=1 // pred_fallthru
      _
    %54 = vsyncpa [#allocation3], 1

// kernel: conv1d_bn_relu.2
$region0: #{conv1d_bn_relu.2}
  #allocation0 [shape = 'u32[]', space=smem, size = 0x4, offset = 0x4, fixed_abs, tag = 'smem constant byte address 0x4 - core index']
  #allocation1 [shape = 'u32[144,128]{1,0:T(1,128)}', space=vmem, size = 0x12000, scoped, tag = 'internal scratch']
  %s0 = inlined_call_operand.vmem [shape: bf16[2,8,256], index: 0, kind: input, shape index: {}, may-alias: {0,1}]
  %s1 = inlined_call_operand.vmem [shape: bf16[2,8,256], index: 1, kind: input, shape index: {}, may-alias: {0,1}]
  %s2 = inlined_call_operand.vmem [shape: bf16[3,8,8], index: 2, kind: input, shape index: {}]
  %s3 = inlined_call_operand.vmem [shape: bf16[2,8,128], index: 3, kind: output, shape index: {0}]
  %s4 = inlined_call_operand.vmem [shape: f32[2,1,8,2], index: 4, kind: output, shape index: {1}]
  %5 = xla_tuple %s3, %s4
  %s6 = sld [smem:[#allocation0]]
  $region61: #{conv1d_bn_relu.2} parent=0
    _
  %s8 = ssub.s32 1, %s6
  %s9 = scalar_select 0, %s8, %s6
  loop: start=0, step=1, limit=4
  $region2: #{conv1d_bn_relu.2} parent=0 // loop_pre_header
    _
  $region3: #{conv1d_bn_relu.2} parent=0 // loop_header
    %s11 = sphi 0, %s15
    %p12 = scmp.ge.s32.totalorder %s11, 4
    %s18 = sphi 0, %s30
    %s19 = sphi 0, %s26
    %s20 = sphi 0, %s18
    %s21 = sphi 0, %s19
    %s22 = sphi 0, %s20
    %s23 = sphi 0, %s21
    %s35 = sphi 0, %s37
    %s38 = sphi 0, %s35
    %s39 = sphi 0, %s38
    %s55 = sphi 0, %s39
    %s65 = sphi 0, %s67
    %s68 = sphi 0, %s65
    %s69 = sphi 0, %s68
    %s85 = sphi 0, %s69
    %s89 = sphi 0, %s89
    %s91 = sphi 0, %s89
    %s92 = sphi 0, %s91
    %s106 = sphi 0, %s92
    %s114 = sphi 0, %s116
    %s117 = sphi 0, %s114
    %s118 = sphi 0, %s117
    %s134 = sphi 0, %s118
    %s142 = sphi 0, %s144
    %s145 = sphi 0, %s142
    %s146 = sphi 0, %s145
    %s162 = sphi 0, %s146
  $region4: #{conv1d_bn_relu.2} parent=0 // loop_header_branch
    %14 = sbr.rel (%p12) target = $region8
  $region5: #{conv1d_bn_relu.2} parent=0 // loop_body
    %s16 = ssub.s32 %s11, 1
    %s17 = ssub.s32 %s11, 2
    %s24 = sadd.s32 1, %s19
    %p25 = scmp.ge.s32.totalorder %s24, 1
    %s26 = scalar_select %p25, 0, %s24
    %s27 = sadd.s32 1, %s18
    %s28 = scalar_select %p25, %s27, %s18
    %p29 = scmp.ge.s32.totalorder %s28, 2
    %s30 = scalar_select %p29, 0, %s28
    %s31 = ssub.s32 %s18, %s30
    %s32 = ssub.s32 %s19, %s26
    %s33 = sor.u32 %s31, %s32
    %p34 = scmp.eq.s32.totalorder %s33, 0
    %s36 = sadd.s32 %s35, 1
    %s37 = scalar_select %p34, %s35, %s36
    %p40 = pneg %p34
    %p41 = scmp.eq.s32.totalorder %s11, 1
    %p42 = por %p40, %p41
    %p43 = scmp.ne.s32.totalorder %s35, %s38
    %p44 = scmp.eq.s32.totalorder %s11, 0
    %p45 = por %p43, %p44
    %p46 = scmp.ne.s32.totalorder %s35, %s38
    %p47 = scmp.eq.s32.totalorder %s16, 1
    %p48 = por %p46, %p47
    %p49 = scmp.ne.s32.totalorder %s38, %s39
    %p50 = scmp.eq.s32.totalorder %s16, 0
    %p51 = por %p49, %p50
    %p52 = scmp.ne.s32.totalorder %s38, %s39
    %p53 = scmp.eq.s32.totalorder %s17, 1
    %p54 = por %p52, %p53
    %p56 = scmp.ne.s32.totalorder %s39, %s55
    %p57 = scmp.eq.s32.totalorder %s17, 0
    %p58 = por %p56, %p57
    %s59 = sadd.s32 %s19, 1
    %s60 = sadd.s32 %s26, 1
    %s61 = ssub.s32 %s18, %s30
    %s62 = ssub.s32 %s59, %s60
    %s63 = sor.u32 %s61, %s62
    %p64 = scmp.eq.s32.totalorder %s63, 0
    %s66 = sadd.s32 %s65, 1
    %s67 = scalar_select %p64, %s65, %s66
    %p70 = pneg %p64
    %p71 = scmp.eq.s32.totalorder %s11, 1
    %p72 = por %p70, %p71
    %p73 = scmp.ne.s32.totalorder %s65, %s68
    %p74 = scmp.eq.s32.totalorder %s11, 0
    %p75 = por %p73, %p74
    %p76 = scmp.ne.s32.totalorder %s65, %s68
    %p77 = scmp.eq.s32.totalorder %s16, 1
    %p78 = por %p76, %p77
    %p79 = scmp.ne.s32.totalorder %s68, %s69
    %p80 = scmp.eq.s32.totalorder %s16, 0
    %p81 = por %p79, %p80
    %p82 = scmp.ne.s32.totalorder %s68, %s69
    %p83 = scmp.eq.s32.totalorder %s17, 1
    %p84 = por %p82, %p83
    %p86 = scmp.ne.s32.totalorder %s69, %s85
    %p87 = scmp.eq.s32.totalorder %s17, 0
    %p88 = por %p86, %p87
    %s90 = sadd.s32 %s89, 1
    %p93 = scmp.eq.s32.totalorder %s11, 1
    %p94 = scmp.ne.s32.totalorder %s89, %s91
    %p95 = scmp.eq.s32.totalorder %s11, 0
    %p96 = por %p94, %p95
    %p97 = scmp.ne.s32.totalorder %s89, %s91
    %p98 = scmp.eq.s32.totalorder %s16, 1
    %p99 = por %p97, %p98
    %p100 = scmp.ne.s32.totalorder %s91, %s92
    %p101 = scmp.eq.s32.totalorder %s16, 0
    %p102 = por %p100, %p101
    %p103 = scmp.ne.s32.totalorder %s91, %s92
    %p104 = scmp.eq.s32.totalorder %s17, 1
    %p105 = por %p103, %p104
    %p107 = scmp.ne.s32.totalorder %s92, %s106
    %p108 = scmp.eq.s32.totalorder %s17, 0
    %p109 = por %p107, %p108
    %s110 = ssub.s32 %s18, %s30
    %s111 = ssub.s32 %s19, %s26
    %s112 = sor.u32 %s110, %s111
    %p113 = scmp.eq.s32.totalorder %s112, 0
    %s115 = sadd.s32 %s114, 1
    %s116 = scalar_select %p113, %s114, %s115
    %p119 = pneg %p113
    %p120 = scmp.eq.s32.totalorder %s11, 1
    %p121 = por %p119, %p120
    %p122 = scmp.ne.s32.totalorder %s114, %s117
    %p123 = scmp.eq.s32.totalorder %s11, 0
    %p124 = por %p122, %p123
    %p125 = scmp.ne.s32.totalorder %s114, %s117
    %p126 = scmp.eq.s32.totalorder %s16, 1
    %p127 = por %p125, %p126
    %p128 = scmp.ne.s32.totalorder %s117, %s118
    %p129 = scmp.eq.s32.totalorder %s16, 0
    %p130 = por %p128, %p129
    %p131 = scmp.ne.s32.totalorder %s117, %s118
    %p132 = scmp.eq.s32.totalorder %s17, 1
    %p133 = por %p131, %p132
    %p135 = scmp.ne.s32.totalorder %s118, %s134
    %p136 = scmp.eq.s32.totalorder %s17, 0
    %p137 = por %p135, %p136
    %s138 = ssub.s32 %s18, %s30
    %s139 = ssub.s32 %s19, %s26
    %s140 = sor.u32 %s138, %s139
    %p141 = scmp.eq.s32.totalorder %s140, 0
    %s143 = sadd.s32 %s142, 1
    %s144 = scalar_select %p141, %s142, %s143
    %p147 = pneg %p141
    %p148 = scmp.eq.s32.totalorder %s11, 1
    %p149 = por %p147, %p148
    %p150 = scmp.ne.s32.totalorder %s142, %s145
    %p151 = scmp.eq.s32.totalorder %s11, 0
    %p152 = por %p150, %p151
    %p153 = scmp.ne.s32.totalorder %s142, %s145
    %p154 = scmp.eq.s32.totalorder %s16, 1
    %p155 = por %p153, %p154
    %p156 = scmp.ne.s32.totalorder %s145, %s146
    %p157 = scmp.eq.s32.totalorder %s16, 0
    %p158 = por %p156, %p157
    %p159 = scmp.ne.s32.totalorder %s145, %s146
    %p160 = scmp.eq.s32.totalorder %s17, 1
    %p161 = por %p159, %p160
    %p163 = scmp.ne.s32.totalorder %s146, %s162
    %p164 = scmp.eq.s32.totalorder %s17, 0
    %p165 = por %p163, %p164
    %p166 = scmp.le.s32.totalorder 1, %s11
    %p167 = scmp.lt.s32.totalorder %s11, 3
    %p168 = pnand %p166, %p167
    %p169 = pneg %p168
    // Predicated region
    $region9: #{conv1d_bn_relu.2} parent=5 // pred_check
      _
    $region10: #{conv1d_bn_relu.2} parent=5 // pred_check_branch
      %171 = sbr.rel (%p168) target = $region12
    $region11: #{conv1d_bn_relu.2} parent=5 // pred_region
      %s172 = ssub.s32 %s11, 1
      // Predicated region
      $region13: #{conv1d_bn_relu.2} parent=11 // pred_check
        %p173 = pneg %p102
      $region14: #{conv1d_bn_relu.2} parent=11 // pred_check_branch
        %175 = sbr.rel (%p173) target = $region16
      $region15: #{conv1d_bn_relu.2} parent=11 // pred_region
        _
      $region16: #{conv1d_bn_relu.2} parent=11 // pred_fallthru
        _
    $region12: #{conv1d_bn_relu.2} parent=5 // pred_fallthru
      _
    %p176 = scmp.lt.s32.totalorder %s11, 2
    // Predicated region
    $region17: #{conv1d_bn_relu.2} parent=5 // pred_check
      %p177 = pneg %p176
    $region18: #{conv1d_bn_relu.2} parent=5 // pred_check_branch
      %179 = sbr.rel (%p177) target = $region20
    $region19: #{conv1d_bn_relu.2} parent=5 // pred_region
      // Predicated region
      $region21: #{conv1d_bn_relu.2} parent=19 // pred_check
        %p180 = pneg %p45
      $region22: #{conv1d_bn_relu.2} parent=19 // pred_check_branch
        %182 = sbr.rel (%p180) target = $region24
      $region23: #{conv1d_bn_relu.2} parent=19 // pred_region
        %p183 = scmp.lt.s32.totalorder %s18, 1
        %s184 = scalar_select %p183, %s18, 1
        %p185 = scmp.lt.s32.totalorder %s19, 1
        %s186 = scalar_select %p185, %s19, 1
        %s187 = smul.addr %s184, 2
        %s188 = sadd.s32 %s186, %s187
        %s189 = smul.addr %s188, 4
        %s190 = scalar_lea.vmem %s0, %s189
      $region24: #{conv1d_bn_relu.2} parent=19 // pred_fallthru
        _
      // Predicated region
      $region25: #{conv1d_bn_relu.2} parent=19 // pred_check
        %p191 = pneg %p75
      $region26: #{conv1d_bn_relu.2} parent=19 // pred_check_branch
        %193 = sbr.rel (%p191) target = $region28
      $region27: #{conv1d_bn_relu.2} parent=19 // pred_region
        %s194 = sadd.s32 %s19, 1
        %p195 = scmp.lt.s32.totalorder %s18, 1
        %s196 = scalar_select %p195, %s18, 1
        %p197 = scmp.lt.s32.totalorder %s194, 1
        %s198 = scalar_select %p197, %s194, 1
        %s199 = smul.addr %s196, 2
        %s200 = sadd.s32 %s198, %s199
        %s201 = smul.addr %s200, 4
        %s202 = scalar_lea.vmem %s1, %s201
        %s203 = sadd.s32 %s19, 1
      $region28: #{conv1d_bn_relu.2} parent=19 // pred_fallthru
        _
    $region20: #{conv1d_bn_relu.2} parent=5 // pred_fallthru
      _
    %p204 = scmp.le.s32.totalorder 1, %s11
    %p205 = scmp.lt.s32.totalorder %s11, 3
    %p206 = pnand %p204, %p205
    %p207 = pneg %p206
    // Predicated region
    $region29: #{conv1d_bn_relu.2} parent=5 // pred_check
      _
    $region30: #{conv1d_bn_relu.2} parent=5 // pred_check_branch
      %209 = sbr.rel (%p206) target = $region32
    $region31: #{conv1d_bn_relu.2} parent=5 // pred_region
      %s210 = ssub.s32 %s11, 1
      %p211 = scmp.lt.s32.totalorder %s20, 1
      %s212 = scalar_select %p211, %s20, 1
      %p213 = scmp.lt.s32.totalorder %s21, 1
      %s214 = scalar_select %p213, %s21, 1
      %s215 = smul.addr %s212, 2
      %s216 = sadd.s32 %s214, %s215
      %s217 = smul.addr %s216, 4
      %s218 = scalar_lea.vmem %s0, %s217
      %p219 = pneg %p51
      %p220 = pneg %p48
      %s221 = sadd.s32 %s21, 1
      %p222 = scmp.lt.s32.totalorder %s20, 1
      %s223 = scalar_select %p222, %s20, 1
      %p224 = scmp.lt.s32.totalorder %s221, 1
      %s225 = scalar_select %p224, %s221, 1
      %s226 = smul.addr %s223, 2
      %s227 = sadd.s32 %s225, %s226
      %s228 = smul.addr %s227, 4
      %s229 = scalar_lea.vmem %s1, %s228
      %p230 = pneg %p81
      %p231 = pneg %p78
      %p232 = pneg %p102
      %p233 = pneg %p99
      %p234 = pneg %p130
      %p235 = pneg %p127
      %p236 = scmp.lt.s32.totalorder %s20, 1
      %s237 = scalar_select %p236, %s20, 1
      %p238 = scmp.lt.s32.totalorder %s21, 0
      %s239 = scalar_select %p238, %s21, 0
      %s240 = sadd.s32 %s239, %s237
      %s241 = smul.addr %s240, 4
      %s242 = scalar_lea.vmem %s3, %s241
      %p243 = pneg %p158
      %p244 = pneg %p155
      %p245 = scmp.lt.s32.totalorder %s20, 1
      %s246 = scalar_select %p245, %s20, 1
      %p247 = scmp.lt.s32.totalorder %s21, 0
      %s248 = scalar_select %p247, %s21, 0
      %s249 = sadd.s32 %s248, %s246
      %s250 = smul.addr %s249, 8
      %s251 = scalar_lea.vmem %s4, %s250
      %p252 = scmp.lt.s32.totalorder %s20, 1
      %s253 = scalar_select %p252, %s20, 1
      %p254 = scmp.lt.s32.totalorder %s21, 1
      %s255 = scalar_select %p254, %s21, 1
      %s256 = smul.addr %s253, 2
      %s257 = sadd.s32 %s255, %s256
      %s258 = smul.addr %s257, 4
      %s259 = scalar_lea.vmem %s0, %s258
      %s260 = sadd.s32 %s21, 1
      %p261 = scmp.lt.s32.totalorder %s20, 1
      %s262 = scalar_select %p261, %s20, 1
      %p263 = scmp.lt.s32.totalorder %s260, 1
      %s264 = scalar_select %p263, %s260, 1
      %s265 = smul.addr %s262, 2
      %s266 = sadd.s32 %s264, %s265
      %s267 = smul.addr %s266, 4
      %s268 = scalar_lea.vmem %s1, %s267
      %s269 = sadd.s32 %s21, 1
      %p270 = scmp.lt.s32.totalorder %s20, 1
      %s271 = scalar_select %p270, %s20, 1
      %p272 = scmp.lt.s32.totalorder %s21, 0
      %s273 = scalar_select %p272, %s21, 0
      %s274 = sadd.s32 %s273, %s271
      %s275 = smul.addr %s274, 4
      %s276 = scalar_lea.vmem %s3, %s275
      %p277 = scmp.lt.s32.totalorder %s20, 1
      %s278 = scalar_select %p277, %s20, 1
      %p279 = scmp.lt.s32.totalorder %s21, 0
      %s280 = scalar_select %p279, %s21, 0
      %s281 = sadd.s32 %s280, %s278
      %s282 = smul.addr %s281, 8
      %s283 = scalar_lea.vmem %s4, %s282
      %v285 = vld [vmem:[%s259] sm:$0xf]
      %v286 = vld [vmem:[%s268] sm:$0xf]
      %v287 = vld [vmem:[%s2] sm:$0xf]
      %s288 = scalar_lea.vmem %s2, 4
      %v289 = vld [vmem:[%s288] sm:$0xf]
      %292 = vrot.lane.b32.xlu0 %v285, 127
      %v293 = vpop.permute.xlu0 %292
      %294 = vrot.lane.b32.xlu0 %v286, 127
      %v295 = vpop.permute.xlu0 %294
      %vm296 = vcmask 1039360
      %v297 = vsel %vm296, %v293, %v295
      %vm298 = vcmask 64512
      %v300 = vsel %vm298, %v289, 0
      %vm302 = vcmask 1043456
      %v304 = vsel %vm302, %v297, 0
      %306 = vmatprep.subr.bf16.mxu0 0
      %307 = vmatpush1.bf16.msra.mxu0 0
      %308 = vmatprep.subr.bf16.mxu0 0
      %309 = vmatpush1.bf16.msra.mxu0 0
      %310 = vmatprep.subr.bf16.mxu0 0
      %311 = vmatpush1.bf16.msra.mxu0 0
      %312 = vmatprep.subr.bf16.mxu0 0
      %313 = vmatpush1.bf16.msra.mxu0 0
      %314 = vmatprep.subr.bf16.mxu0 0
      %315 = vmatpush1.bf16.msra.mxu0 0
      %316 = vmatprep.subr.bf16.mxu0 0
      %317 = vmatpush1.bf16.msra.mxu0 0
      %318 = vmatprep.subr.bf16.mxu0 0
      %319 = vmatpush1.bf16.msra.mxu0 0
      %320 = vmatprep.subr.bf16.mxu0 0
      %321 = vmatpush1.bf16.msra.mxu0 %v304
      %322 = vmatprep.subr.bf16.mxu0 0
      %323 = vmatpush2.bf16.msra.mxu0 0
      %324 = vmatprep.subr.bf16.mxu0 0
      %325 = vmatpush2.bf16.msra.mxu0 0
      %326 = vmatprep.subr.bf16.mxu0 0
      %327 = vmatpush2.bf16.msra.mxu0 0
      %328 = vmatprep.subr.bf16.mxu0 0
      %329 = vmatpush2.bf16.msra.mxu0 0
      %330 = vmatprep.subr.bf16.mxu0 0
      %331 = vmatpush2.bf16.msra.mxu0 0
      %332 = vmatprep.subr.bf16.mxu0 0
      %333 = vmatpush2.bf16.msra.mxu0 0
      %334 = vmatprep.subr.bf16.mxu0 0
      %335 = vmatpush2.bf16.msra.mxu0 0
      %336 = vmatprep.subr.bf16.mxu0 0
      %337 = vmatpush2.bf16.msra.mxu0 0
      %338 = vmatprep.mubr.bf16.mxu0 0
      %339 = vmatmul.mubr.bf16.gmra.mxu0 %v300
      %v340 = vpop.f32.mrf.mxu0
      %v341 = vadd.f32 0.0, %v340
      %v342 = vpop.f32.mrf.mxu0
      %v343 = vpop.f32.mrf.mxu0
      %v344 = vpop.f32.mrf.mxu0
      %345 = vdwg.mxu0
      %v347 = vsel %vm298, %v287, 0
      %v350 = vsel %vm302, %v285, 0
      %352 = vmatprep.subr.bf16.mxu0 0
      %353 = vmatpush1.bf16.msra.mxu0 0
      %354 = vmatprep.subr.bf16.mxu0 0
      %355 = vmatpush1.bf16.msra.mxu0 0
      %356 = vmatprep.subr.bf16.mxu0 0
      %357 = vmatpush1.bf16.msra.mxu0 0
      %358 = vmatprep.subr.bf16.mxu0 0
      %359 = vmatpush1.bf16.msra.mxu0 0
      %360 = vmatprep.subr.bf16.mxu0 0
      %361 = vmatpush1.bf16.msra.mxu0 0
      %362 = vmatprep.subr.bf16.mxu0 0
      %363 = vmatpush1.bf16.msra.mxu0 0
      %364 = vmatprep.subr.bf16.mxu0 0
      %365 = vmatpush1.bf16.msra.mxu0 0
      %366 = vmatprep.subr.bf16.mxu0 0
      %367 = vmatpush1.bf16.msra.mxu0 %v350
      %368 = vmatprep.subr.bf16.mxu0 0
      %369 = vmatpush2.bf16.msra.mxu0 0
      %370 = vmatprep.subr.bf16.mxu0 0
      %371 = vmatpush2.bf16.msra.mxu0 0
      %372 = vmatprep.subr.bf16.mxu0 0
      %373 = vmatpush2.bf16.msra.mxu0 0
      %374 = vmatprep.subr.bf16.mxu0 0
      %375 = vmatpush2.bf16.msra.mxu0 0
      %376 = vmatprep.subr.bf16.mxu0 0
      %377 = vmatpush2.bf16.msra.mxu0 0
      %378 = vmatprep.subr.bf16.mxu0 0
      %379 = vmatpush2.bf16.msra.mxu0 0
      %380 = vmatprep.subr.bf16.mxu0 0
      %381 = vmatpush2.bf16.msra.mxu0 0
      %382 = vmatprep.subr.bf16.mxu0 0
      %383 = vmatpush2.bf16.msra.mxu0 0
      %384 = vmatprep.mubr.bf16.mxu0 0
      %385 = vmatmul.mubr.bf16.gmra.mxu0 %v347
      %v386 = vpop.f32.mrf.mxu0
      %v387 = vadd.f32 %v341, %v386
      %v388 = vpop.f32.mrf.mxu0
      %v389 = vpop.f32.mrf.mxu0
      %v390 = vpop.f32.mrf.mxu0
      %391 = vdwg.mxu0
      %s392 = scalar_lea.vmem %s2, 8
      %v393 = vld [vmem:[%s392] sm:$0xf]
      %394 = vrot.lane.b32.xlu0 %v285, 126
      %v395 = vpop.permute.xlu0 %394
      %396 = vrot.lane.b32.xlu0 %v286, 126
      %v397 = vpop.permute.xlu0 %396
      %vm398 = vcmask 1031168
      %v399 = vsel %vm398, %v395, %v397
      %v401 = vsel %vm298, %v393, 0
      %v404 = vsel %vm302, %v399, 0
      %406 = vmatprep.subr.bf16.mxu0 0
      %407 = vmatpush1.bf16.msra.mxu0 0
      %408 = vmatprep.subr.bf16.mxu0 0
      %409 = vmatpush1.bf16.msra.mxu0 0
      %410 = vmatprep.subr.bf16.mxu0 0
      %411 = vmatpush1.bf16.msra.mxu0 0
      %412 = vmatprep.subr.bf16.mxu0 0
      %413 = vmatpush1.bf16.msra.mxu0 0
      %414 = vmatprep.subr.bf16.mxu0 0
      %415 = vmatpush1.bf16.msra.mxu0 0
      %416 = vmatprep.subr.bf16.mxu0 0
      %417 = vmatpush1.bf16.msra.mxu0 0
      %418 = vmatprep.subr.bf16.mxu0 0
      %419 = vmatpush1.bf16.msra.mxu0 0
      %420 = vmatprep.subr.bf16.mxu0 0
      %421 = vmatpush1.bf16.msra.mxu0 %v404
      %422 = vmatprep.subr.bf16.mxu0 0
      %423 = vmatpush2.bf16.msra.mxu0 0
      %424 = vmatprep.subr.bf16.mxu0 0
      %425 = vmatpush2.bf16.msra.mxu0 0
      %426 = vmatprep.subr.bf16.mxu0 0
      %427 = vmatpush2.bf16.msra.mxu0 0
      %428 = vmatprep.subr.bf16.mxu0 0
      %429 = vmatpush2.bf16.msra.mxu0 0
      %430 = vmatprep.subr.bf16.mxu0 0
      %431 = vmatpush2.bf16.msra.mxu0 0
      %432 = vmatprep.subr.bf16.mxu0 0
      %433 = vmatpush2.bf16.msra.mxu0 0
      %434 = vmatprep.subr.bf16.mxu0 0
      %435 = vmatpush2.bf16.msra.mxu0 0
      %436 = vmatprep.subr.bf16.mxu0 0
      %437 = vmatpush2.bf16.msra.mxu0 0
      %438 = vmatprep.mubr.bf16.mxu0 0
      %439 = vmatmul.mubr.bf16.gmra.mxu0 %v401
      %v440 = vpop.f32.mrf.mxu0
      %v441 = vadd.f32 0.0, %v440
      %v442 = vpop.f32.mrf.mxu0
      %v443 = vpop.f32.mrf.mxu0
      %v444 = vpop.f32.mrf.mxu0
      %445 = vdwg.mxu0
      %v446 = vadd.f32 %v387, %v441
      %v447 = vpack.c.bf16 %v446, %v446
      %448 = vst [vmem:[%s276] sm:$0xf] %v447
      %p449 = scmp.lt.s32.totalorder %s21, 0
      // Predicated region
      $region33: #{conv1d_bn_relu.2} parent=31 // pred_check
        %p450 = pneg %p449
      $region34: #{conv1d_bn_relu.2} parent=31 // pred_check_branch
        %452 = sbr.rel (%p450) target = $region36
      $region35: #{conv1d_bn_relu.2} parent=31 // pred_region
        %453 = vadd.xlane.f32.xlu0 %v446
        %v454 = vpop.xlane.xlu0 %453
        %v455 = vmul.f32 %v446, %v446
        %456 = vadd.xlane.f32.xlu0 %v455
        %v457 = vpop.xlane.xlu0 %456
        %vm458 = vcmask 7168
        %v459 = vsel %vm458, %v454, %v457
        %vm460 = vcmask 15360
        %461 = vst.msk [vmem:[%s283] sm:$0xff] %vm460, %v459
      $region36: #{conv1d_bn_relu.2} parent=31 // pred_fallthru
        _
      %p462 = scmp.eq.s32.totalorder %s21, 0
      // Predicated region
      $region37: #{conv1d_bn_relu.2} parent=31 // pred_check
        %p463 = pneg %p462
      $region38: #{conv1d_bn_relu.2} parent=31 // pred_check_branch
        %465 = sbr.rel (%p463) target = $region40
      $region39: #{conv1d_bn_relu.2} parent=31 // pred_region
        %v466 = vlaneseq
        %v467 = vand.u32 %v466, 127
        %s468 = smul.u32 %s21, 128
        %v469 = vstv %s468
        %v470 = vadd.s32 %v469, %v467
        %vm471 = vcmp.lt.s32.totalorder %v470, 16
        %v472 = vsel %vm471, 1, 0
        %vm473 = vcmp.eq.s32.totalorder %v472, 1
        %v474 = vsel %vm473, %v446, 0.0
        %475 = vadd.xlane.f32.xlu0 %v474
        %v476 = vpop.xlane.xlu0 %475
        %v477 = vmul.f32 %v474, %v474
        %478 = vadd.xlane.f32.xlu0 %v477
        %v479 = vpop.xlane.xlu0 %478
        %vm480 = vcmask 7168
        %v481 = vsel %vm480, %v476, %v479
        %vm482 = vcmask 15360
        %483 = vst.msk [vmem:[%s283] sm:$0xff] %vm482, %v481
      $region40: #{conv1d_bn_relu.2} parent=31 // pred_fallthru
        _
      %p484 = scmp.lt.s32.totalorder %s20, 1
      %s485 = scalar_select %p484, %s20, 1
      %p486 = scmp.lt.s32.totalorder %s21, 0
      %s487 = scalar_select %p486, %s21, 0
      %s488 = sadd.s32 %s487, %s485
      %s489 = smul.addr %s488, 4
      %s490 = scalar_lea.vmem %s3, %s489
      %p491 = scmp.lt.s32.totalorder %s20, 1
      %s492 = scalar_select %p491, %s20, 1
      %p493 = scmp.lt.s32.totalorder %s21, 0
      %s494 = scalar_select %p493, %s21, 0
      %s495 = sadd.s32 %s494, %s492
      %s496 = smul.addr %s495, 8
      %s497 = scalar_lea.vmem %s4, %s496
      // Predicated region
      $region41: #{conv1d_bn_relu.2} parent=31 // pred_check
        %p498 = pneg %p127
      $region42: #{conv1d_bn_relu.2} parent=31 // pred_check_branch
        %500 = sbr.rel (%p498) target = $region44
      $region43: #{conv1d_bn_relu.2} parent=31 // pred_region
        _
      $region44: #{conv1d_bn_relu.2} parent=31 // pred_fallthru
        _
      // Predicated region
      $region45: #{conv1d_bn_relu.2} parent=31 // pred_check
        %p501 = pneg %p155
      $region46: #{conv1d_bn_relu.2} parent=31 // pred_check_branch
        %503 = sbr.rel (%p501) target = $region48
      $region47: #{conv1d_bn_relu.2} parent=31 // pred_region
        _
      $region48: #{conv1d_bn_relu.2} parent=31 // pred_fallthru
        _
    $region32: #{conv1d_bn_relu.2} parent=5 // pred_fallthru
      _
    %p504 = scmp.le.s32.totalorder 2, %s11
    // Predicated region
    $region49: #{conv1d_bn_relu.2} parent=5 // pred_check
      %p505 = pneg %p504
    $region50: #{conv1d_bn_relu.2} parent=5 // pred_check_branch
      %507 = sbr.rel (%p505) target = $region52
    $region51: #{conv1d_bn_relu.2} parent=5 // pred_region
      %s508 = ssub.s32 %s11, 2
      // Predicated region
      $region53: #{conv1d_bn_relu.2} parent=51 // pred_check
        %p509 = pneg %p133
      $region54: #{conv1d_bn_relu.2} parent=51 // pred_check_branch
        %511 = sbr.rel (%p509) target = $region56
      $region55: #{conv1d_bn_relu.2} parent=51 // pred_region
        %p512 = scmp.lt.s32.totalorder %s22, 1
        %s513 = scalar_select %p512, %s22, 1
        %p514 = scmp.lt.s32.totalorder %s23, 0
        %s515 = scalar_select %p514, %s23, 0
        %s516 = sadd.s32 %s515, %s513
        %s517 = smul.addr %s516, 4
        %s518 = scalar_lea.vmem %s3, %s517
      $region56: #{conv1d_bn_relu.2} parent=51 // pred_fallthru
        _
      // Predicated region
      $region57: #{conv1d_bn_relu.2} parent=51 // pred_check
        %p519 = pneg %p161
      $region58: #{conv1d_bn_relu.2} parent=51 // pred_check_branch
        %521 = sbr.rel (%p519) target = $region60
      $region59: #{conv1d_bn_relu.2} parent=51 // pred_region
        %p522 = scmp.lt.s32.totalorder %s22, 1
        %s523 = scalar_select %p522, %s22, 1
        %p524 = scmp.lt.s32.totalorder %s23, 0
        %s525 = scalar_select %p524, %s23, 0
        %s526 = sadd.s32 %s525, %s523
        %s527 = smul.addr %s526, 8
        %s528 = scalar_lea.vmem %s4, %s527
      $region60: #{conv1d_bn_relu.2} parent=51 // pred_fallthru
        _
    $region52: #{conv1d_bn_relu.2} parent=5 // pred_fallthru
      _
  $region6: #{conv1d_bn_relu.2} parent=0 // loop_footer
    %s15 = sadd.s32 1, %s11
  $region7: #{conv1d_bn_relu.2} parent=0 // loop_footer_branch
    %10 = sbr.rel target = $region3
  $region8: #{conv1d_bn_relu.2} parent=0 // loop_exit
    _

</llo_original>
